<compile_context>
chip_gen: v5e
topology: v5e:2x2
jax: 0.10.0
libtpu: 0.0.40
codegen_flags: <defaults>
</compile_context>

<pallas_src>
import jax
import jax.numpy as jnp
from jax.experimental import pallas as pl
from jax.experimental.pallas import tpu as pltpu


# ----------------------------- degree / mask construction (plain JAX glue) ----

def _get_input_degrees(in_features):
    return jnp.arange(1, in_features + 1)


def _hidden_degrees(out_features, autoregressive_features):
    # non-output, non-random mask degrees (same formula as MaskedLinear)
    max_ = max(1, autoregressive_features - 1)
    min_ = min(1, autoregressive_features - 1)
    return jnp.arange(out_features) % max_ + min_


def _mask_and_degrees(in_degrees, out_features, autoregressive_features):
    out_degrees = _hidden_degrees(out_features, autoregressive_features)
    mask = (out_degrees[:, None] >= in_degrees[None, :]).astype(jnp.float32)
    return mask, out_degrees


# ----------------------------- Pallas kernel ----------------------------------

def _masked_resblock_kernel(x_ref, w0_ref, b0_ref, w1_ref, b1_ref, o_ref):
    compute_dtype = w0_ref.dtype
    x = x_ref[...]                                    # (tb, 128) f32
    t = jnp.maximum(x, 0.0).astype(compute_dtype)     # activation
    t = jnp.dot(t, w0_ref[...],
                preferred_element_type=jnp.float32) + b0_ref[...]
    t = jnp.maximum(t, 0.0).astype(compute_dtype)     # activation
    # dropout with p=0.0 is the identity; use_batch_norm=False; context=None.
    t = jnp.dot(t, w1_ref[...],
                preferred_element_type=jnp.float32) + b1_ref[...]
    o_ref[...] = x + t                                # residual (f32)


# ----------------------------- one-time parameter packing ---------------------

def _cdiv(a, b):
    return -(-a // b)


def pack_params(w0m, b0, w1m, b1, *, weight_dtype=jnp.bfloat16):
    """One-time prep. w*m: (F, F) pre-masked weights transposed to (in, out),
    b*: (F,). If 128 % F == 0, packs `pack = 128 // F` logical rows per 128-lane
    physical row via block-diagonal weights kron(I_pack, W) and tiled biases.
    Otherwise falls back to zero-padding F up to a multiple of 128 (pack=1)."""
    F = w0m.shape[0]
    if F < 128 and 128 % F == 0:
        pack = 128 // F
        eye = jnp.eye(pack, dtype=w0m.dtype)
        w0p = jnp.kron(eye, w0m)                       # (128, 128) block-diag
        w1p = jnp.kron(eye, w1m)
        b0p = jnp.tile(b0.reshape(1, F), (1, pack))    # (1, 128)
        b1p = jnp.tile(b1.reshape(1, F), (1, pack))
    else:
        pack = 1
        Fp = max(128, _cdiv(F, 128) * 128)
        w0p = jnp.pad(w0m, ((0, Fp - F), (0, Fp - F)))
        w1p = jnp.pad(w1m, ((0, Fp - F), (0, Fp - F)))
        b0p = jnp.pad(b0.reshape(1, F), ((0, 0), (0, Fp - F)))
        b1p = jnp.pad(b1.reshape(1, F), ((0, 0), (0, Fp - F)))
    return dict(
        w0=w0p.astype(weight_dtype), b0=b0p.astype(jnp.float32),
        w1=w1p.astype(weight_dtype), b1=b1p.astype(jnp.float32),
        pack=pack, features=F)


# ----------------------------- wrapper (hot path) ------------------------------

def masked_residual_block(x, params, *, block_batch=2048):
    """x: (N, F) float32. params: output of pack_params(). Returns (N, F)."""
    pack = params["pack"]
    F = params["features"]
    Fp = params["w0"].shape[0]
    N = x.shape[0]
    assert x.shape[1] == F

    # Row-pack: (N, F) -> (Nr, pack*F). Only the tail (< pack rows) is padded.
    Nr = _cdiv(N, pack)
    tail = Nr * pack - N
    if tail:
        x = jnp.pad(x, ((0, tail), (0, 0)))
    xr = x.reshape(Nr, pack * F)
    if pack * F != Fp:                                  # fallback (pack == 1) only
        xr = jnp.pad(xr, ((0, 0), (0, Fp - pack * F)))

    # Batch tiling over packed rows: 8-aligned tiles, >= 2 grid steps when
    # possible (v7x megacore), ragged last block masked by Pallas.
    if Nr <= 8:
        tb = Nr                                         # single full-extent block
    else:
        half8 = _cdiv(_cdiv(Nr, 2), 8) * 8
        tb = min(block_batch, half8)
    grid = (_cdiv(Nr, tb),)

    out = pl.pallas_call(
        _masked_resblock_kernel,
        out_shape=jax.ShapeDtypeStruct((Nr, Fp), x.dtype),
        grid_spec=pltpu.PrefetchScalarGridSpec(
            num_scalar_prefetch=0,
            grid=grid,
            in_specs=[
                pl.BlockSpec((tb, Fp), lambda i: (i, 0)),   # packed x tile
                pl.BlockSpec((Fp, Fp), lambda i: (0, 0)),   # W0 (grid-invariant)
                pl.BlockSpec((1, Fp), lambda i: (0, 0)),    # b0
                pl.BlockSpec((Fp, Fp), lambda i: (0, 0)),   # W1 (grid-invariant)
                pl.BlockSpec((1, Fp), lambda i: (0, 0)),    # b1
            ],
            out_specs=pl.BlockSpec((tb, Fp), lambda i: (i, 0)),
        ),
        compiler_params=pltpu.CompilerParams(
            dimension_semantics=("parallel",)),  # megacore batch sharding on v7x
    )(xr, params["w0"], params["b0"], params["w1"], params["b1"])

    # Unpack. Slices are no-ops (elided) when no padding was applied.
    if pack * F != Fp:
        out = out[:, : pack * F]
    out = out.reshape(Nr * pack, F)
    if tail:
        out = out[:N]
    return out


# ----------------------------- parameter setup ---------------------------------

def build_params(key, features, autoregressive_features):
    """Deterministic synthetic parameters matching MaskedResidualBlock.__init__."""
    # in_degrees of a residual block inside a MADE trunk are hidden-layer degrees.
    in_degrees = _hidden_degrees(features, autoregressive_features)

    mask0, deg0 = _mask_and_degrees(in_degrees, features, autoregressive_features)
    mask1, deg1 = _mask_and_degrees(deg0, features, autoregressive_features)

    # residual-block validity check (mirrors the RuntimeError in __init__);
    # host sync only at parameter-build time, never in the hot path.
    assert bool(jnp.all(deg1 >= in_degrees)), "output degrees < input degrees"

    k0, k1, k2, k3 = jax.random.split(key, 4)
    bound = 1.0 / (features ** 0.5)
    # linear_0: standard nn.Linear init (uniform +- 1/sqrt(fan_in))
    w0 = jax.random.uniform(k0, (features, features), jnp.float32, -bound, bound)
    b0 = jax.random.uniform(k1, (features,), jnp.float32, -bound, bound)
    # linear_1: zero_initialization=True -> uniform(-1e-3, 1e-3)
    w1 = jax.random.uniform(k2, (features, features), jnp.float32, -1e-3, 1e-3)
    b1 = jax.random.uniform(k3, (features,), jnp.float32, -1e-3, 1e-3)

    # Fold masks into weights and transpose to (in_features, out_features)
    # so the kernel computes x @ W + b (== F.linear(x, W*mask, b)).
    w0m = (w0 * mask0).T
    w1m = (w1 * mask1).T
    return w0m, b0, w1m, b1


# ----------------------------- reference (plain JAX) ----------------------------

def reference_forward(x, w0m, b0, w1m, b1):
    t = jnp.maximum(x, 0.0)
    t = t @ w0m + b0
    t = jnp.maximum(t, 0.0)
    t = t @ w1m + b1
    return x + t


# ----------------------------- main ---------------------------------------------

if __name__ == "__main__":
    key = jax.random.PRNGKey(0)
    kx, kp, kx2, kx3 = jax.random.split(key, 4)

    features = 32                 # block width (len(in_degrees))
    autoregressive_features = 8   # number of MADE input dimensions
    w0m, b0, w1m, b1 = build_params(kp, features, autoregressive_features)

    params_f32 = pack_params(w0m, b0, w1m, b1, weight_dtype=jnp.float32)
    params_bf16 = pack_params(w0m, b0, w1m, b1, weight_dtype=jnp.bfloat16)

    # --- small batch, f32 weights: strict correctness check ---------------------
    batch = 16
    x = jax.random.normal(kx, (batch, features), dtype=jnp.float32)
    ref = reference_forward(x, w0m, b0, w1m, b1)

    out_f32 = jax.block_until_ready(masked_residual_block(x, params_f32))
    assert out_f32.shape == (batch, features)
    assert jnp.allclose(out_f32, ref, atol=1e-5, rtol=1e-5), "f32 mismatch vs reference"

    # --- bf16-weight MXU path (activations quantized to bf16 before each matmul,
    #     f32 accumulation) — relaxed tolerance ----------------------------------
    out_bf16 = jax.block_until_ready(masked_residual_block(x, params_bf16))
    assert jnp.allclose(out_bf16, ref, atol=1e-2, rtol=1e-2), "bf16 mismatch vs reference"

    # --- larger batch: multi-step parallel grid + ragged last block -------------
    batch2 = 1000
    x2 = jax.random.normal(kx2, (batch2, features), dtype=jnp.float32)
    out2 = jax.block_until_ready(masked_residual_block(x2, params_bf16))
    ref2 = reference_forward(x2, w0m, b0, w1m, b1)
    assert out2.shape == (batch2, features)
    assert jnp.allclose(out2, ref2, atol=1e-2, rtol=1e-2), "tiled bf16 mismatch vs reference"

    # --- batch not a multiple of the packing factor: exercises tail pad + slice --
    batch3 = 37
    x3 = jax.random.normal(kx3, (batch3, features), dtype=jnp.float32)
    out3 = jax.block_until_ready(masked_residual_block(x3, params_f32))
    ref3 = reference_forward(x3, w0m, b0, w1m, b1)
    assert out3.shape == (batch3, features)
    assert jnp.allclose(out3, ref3, atol=1e-5, rtol=1e-5), "ragged f32 mismatch vs reference"

    # TODO(synk): context / GLU path, batch-norm and dropout>0 branches are
    # disabled in this default config and not implemented in the kernel.
    # TODO(synk): when stacking multiple residual blocks (full MADE trunk), fuse
    # them into one pallas_call so activations stay VMEM-resident between blocks
    # (each fused block removes one full activation read+write of HBM traffic);
    # out of scope for this single module.
    print("KERNEL_OK")
</pallas_src>

<mosaic_0001>
module attributes {stable_mosaic.version = 11 : i64} {
  func.func @_masked_resblock_kernel(%arg0: i32, %arg1: memref<4x128xf32, #tpu.memory_space<vmem>>, %arg2: memref<128x128xf32, #tpu.memory_space<vmem>>, %arg3: memref<1x128xf32, #tpu.memory_space<vmem>>, %arg4: memref<128x128xf32, #tpu.memory_space<vmem>>, %arg5: memref<1x128xf32, #tpu.memory_space<vmem>>, %arg6: memref<4x128xf32, #tpu.memory_space<vmem>>) attributes {dimension_semantics = [#tpu.dimension_semantics<parallel>], iteration_bounds = array<i64: 1>, scalar_prefetch = 0 : i64, scratch_operands = 0 : i64, tpu.core_type = #tpu.core_type<tc>, window_params = [{transform_indices = @transform_0, window_bounds = array<i64: 4, 128>}, {pipeline_mode = #tpu.pipeline_mode<synchronous>, transform_indices = @transform_1, window_bounds = array<i64: 128, 128>}, {pipeline_mode = #tpu.pipeline_mode<synchronous>, transform_indices = @transform_2, window_bounds = array<i64: 1, 128>}, {pipeline_mode = #tpu.pipeline_mode<synchronous>, transform_indices = @transform_3, window_bounds = array<i64: 128, 128>}, {pipeline_mode = #tpu.pipeline_mode<synchronous>, transform_indices = @transform_4, window_bounds = array<i64: 1, 128>}, {transform_indices = @transform_5, window_bounds = array<i64: 4, 128>}]} {
    %c0 = arith.constant 0 : index
    %c0_0 = arith.constant 0 : index
    %0 = vector.load %arg1[%c0, %c0_0] : memref<4x128xf32, #tpu.memory_space<vmem>>, vector<4x128xf32>
    %cst = arith.constant 0.000000e+00 : f32
    %1 = vector.broadcast %cst : f32 to vector<4x128xf32>
    %2 = arith.maximumf %0, %1 : vector<4x128xf32>
    %c0_1 = arith.constant 0 : index
    %c0_2 = arith.constant 0 : index
    %3 = vector.load %arg2[%c0_1, %c0_2] : memref<128x128xf32, #tpu.memory_space<vmem>>, vector<128x128xf32>
    %cst_3 = arith.constant dense<0.000000e+00> : vector<4x128xf32>
    %4 = tpu.matmul %2, %3, %cst_3 {dimension_numbers = #tpu.dot_dimension_numbers<[1], [0], [0], [1], [0, 0, 1, 1], [], []>} : vector<4x128xf32>, vector<128x128xf32>, vector<4x128xf32> -> vector<4x128xf32>
    %c0_4 = arith.constant 0 : index
    %c0_5 = arith.constant 0 : index
    %5 = vector.load %arg3[%c0_4, %c0_5] : memref<1x128xf32, #tpu.memory_space<vmem>>, vector<1x128xf32>
    %6 = vector.broadcast %5 : vector<1x128xf32> to vector<4x128xf32>
    %7 = arith.addf %4, %6 : vector<4x128xf32>
    %cst_6 = arith.constant 0.000000e+00 : f32
    %8 = vector.broadcast %cst_6 : f32 to vector<4x128xf32>
    %9 = arith.maximumf %7, %8 : vector<4x128xf32>
    %c0_7 = arith.constant 0 : index
    %c0_8 = arith.constant 0 : index
    %10 = vector.load %arg4[%c0_7, %c0_8] : memref<128x128xf32, #tpu.memory_space<vmem>>, vector<128x128xf32>
    %cst_9 = arith.constant dense<0.000000e+00> : vector<4x128xf32>
    %11 = tpu.matmul %9, %10, %cst_9 {dimension_numbers = #tpu.dot_dimension_numbers<[1], [0], [0], [1], [0, 0, 1, 1], [], []>} : vector<4x128xf32>, vector<128x128xf32>, vector<4x128xf32> -> vector<4x128xf32>
    %c0_10 = arith.constant 0 : index
    %c0_11 = arith.constant 0 : index
    %12 = vector.load %arg5[%c0_10, %c0_11] : memref<1x128xf32, #tpu.memory_space<vmem>>, vector<1x128xf32>
    %13 = vector.broadcast %12 : vector<1x128xf32> to vector<4x128xf32>
    %14 = arith.addf %11, %13 : vector<4x128xf32>
    %15 = arith.addf %0, %14 : vector<4x128xf32>
    %c0_12 = arith.constant 0 : index
    %c0_13 = arith.constant 0 : index
    %16 = vector.load %arg6[%c0_12, %c0_13] : memref<4x128xf32, #tpu.memory_space<vmem>>, vector<4x128xf32>
    tpu.vector_store %arg6[%c0_12, %c0_13], %15 {strides = array<i32>} : memref<4x128xf32, #tpu.memory_space<vmem>>, vector<4x128xf32>,
    return
  }
  func.func @transform_0(%arg0: i32) -> (i32, i32) {
    %c0_i32 = arith.constant 0 : i32
    %c0_i32_0 = arith.constant 0 : i32
    return %arg0, %c0_i32 : i32, i32
  }
  func.func @transform_1(%arg0: i32) -> (i32, i32) {
    %c0_i32 = arith.constant 0 : i32
    %c0_i32_0 = arith.constant 0 : i32
    %c0_i32_1 = arith.constant 0 : i32
    return %c0_i32, %c0_i32_0 : i32, i32
  }
  func.func @transform_2(%arg0: i32) -> (i32, i32) {
    %c0_i32 = arith.constant 0 : i32
    %c0_i32_0 = arith.constant 0 : i32
    %c0_i32_1 = arith.constant 0 : i32
    return %c0_i32, %c0_i32_0 : i32, i32
  }
  func.func @transform_3(%arg0: i32) -> (i32, i32) {
    %c0_i32 = arith.constant 0 : i32
    %c0_i32_0 = arith.constant 0 : i32
    %c0_i32_1 = arith.constant 0 : i32
    return %c0_i32, %c0_i32_0 : i32, i32
  }
  func.func @transform_4(%arg0: i32) -> (i32, i32) {
    %c0_i32 = arith.constant 0 : i32
    %c0_i32_0 = arith.constant 0 : i32
    %c0_i32_1 = arith.constant 0 : i32
    return %c0_i32, %c0_i32_0 : i32, i32
  }
  func.func @transform_5(%arg0: i32) -> (i32, i32) {
    %c0_i32 = arith.constant 0 : i32
    %c0_i32_0 = arith.constant 0 : i32
    return %arg0, %c0_i32 : i32, i32
  }
}

</mosaic_0001>

<llo_original>
// kernel: tpu_custom_call.1
$region0: #{tpu_custom_call.1}
  #allocation0 [shape = 'u32[]', space=smem, size = 0x4, offset = 0x4, fixed_abs, tag = 'smem constant byte address 0x4 - core index']
  #allocation1 [shape = 'u32[72,128]{1,0:T(1,128)}', space=vmem, size = 0x9000, scoped, tag = 'internal scratch']
  %s0 = inlined_call_operand.hbm [shape: f32[4,128], index: 0, kind: input, shape index: {}]
  %s1 = inlined_call_operand.hbm [shape: f32[128,128], index: 1, kind: input, shape index: {}]
  %s2 = inlined_call_operand.vmem [shape: f32[1,128], index: 2, kind: input, shape index: {}]
  %s3 = inlined_call_operand.hbm [shape: f32[128,128], index: 3, kind: input, shape index: {}]
  %s4 = inlined_call_operand.vmem [shape: f32[1,128], index: 4, kind: input, shape index: {}]
  %s5 = inlined_call_operand.hbm [shape: f32[4,128], index: 5, kind: output, shape index: {}]
  %s6 = sld [smem:[#allocation0]]
  $region42: #{tpu_custom_call.1} parent=0
    _
  %s8 = ssub.s32 1, %s6
  %s9 = scalar_select 0, %s8, %s6
  $region1: #{tpu_custom_call.1} parent=0
    #allocation2 [shape = 'u8[2048]{0}', space=vmem, size = 0x800, scoped, tag = 'input window, operand 0, single buffered']
    #allocation3 [shape = 's32[1]{0}', space=sflag, size = 0x4, scoped, tag = 'scoped memory for tpu_custom_call.1']
    #allocation4 [shape = 's32[1]{0}', space=sflag, size = 0x4, scoped, tag = 'scoped memory for tpu_custom_call.1']
    #allocation5 [shape = 'u8[65536]{0}', space=vmem, size = 0x10000, scoped, tag = 'input window, operand 1, single buffered']
    #allocation6 [shape = 's32[1]{0}', space=sflag, size = 0x4, scoped, tag = 'scoped memory for tpu_custom_call.1']
    #allocation7 [shape = 'u8[65536]{0}', space=vmem, size = 0x10000, scoped, tag = 'input window, operand 3, single buffered']
    #allocation8 [shape = 'u8[2048]{0}', space=vmem, size = 0x800, scoped, tag = 'output window, operand 0, single buffered']
    %10 = vsyncpa [#allocation3], 0
    %11 = vsyncpa [#allocation6], 0
    %12 = vsyncpa [#allocation4], 0
    // Predicated region
    $region2: #{tpu_custom_call.1} parent=1 // pred_check
      _
    $region3: #{tpu_custom_call.1} parent=1 // pred_check_branch
      %14 = sbr.rel (0) target = $region5
    $region4: #{tpu_custom_call.1} parent=1 // pred_region
      %16 = vsyncadd [#allocation3], 0
      %s18 = sshll.u32 %s0, 4
      %s19 = int_to_ptr.hbm [resolvable:$true] %s18
      %s20 = sshll.u32 [#allocation2], 4
      %s21 = int_to_ptr.vmem [resolvable:$true] %s20
      %23 = dma.hbm_to_vmem [thread:$0]  %s19, 64, %s21, [#allocation3]
    $region5: #{tpu_custom_call.1} parent=1 // pred_fallthru
      _
    // Predicated region
    $region6: #{tpu_custom_call.1} parent=1 // pred_check
      _
    $region7: #{tpu_custom_call.1} parent=1 // pred_check_branch
      %25 = sbr.rel (0) target = $region9
    $region8: #{tpu_custom_call.1} parent=1 // pred_region
      %27 = vsyncadd [#allocation6], 0
      %s28 = sshll.u32 %s1, 4
      %s29 = int_to_ptr.hbm [resolvable:$true] %s28
      %s30 = sshll.u32 [#allocation5], 4
      %s31 = int_to_ptr.vmem [resolvable:$true] %s30
      %36 = dma.hbm_to_vmem [thread:$0]  %s29, 2048, %s31, [#allocation6], 128, 128, 8
    $region9: #{tpu_custom_call.1} parent=1 // pred_fallthru
      _
    // Predicated region
    $region10: #{tpu_custom_call.1} parent=1 // pred_check
      _
    $region11: #{tpu_custom_call.1} parent=1 // pred_check_branch
      %38 = sbr.rel (0) target = $region13
    $region12: #{tpu_custom_call.1} parent=1 // pred_region
      _
    $region13: #{tpu_custom_call.1} parent=1 // pred_fallthru
      _
    // Predicated region
    $region14: #{tpu_custom_call.1} parent=1 // pred_check
      _
    $region15: #{tpu_custom_call.1} parent=1 // pred_check_branch
      %40 = sbr.rel (0) target = $region17
    $region16: #{tpu_custom_call.1} parent=1 // pred_region
      %42 = vsyncadd [#allocation6], 0
      %s43 = sshll.u32 %s3, 4
      %s44 = int_to_ptr.hbm [resolvable:$true] %s43
      %s45 = sshll.u32 [#allocation7], 4
      %s46 = int_to_ptr.vmem [resolvable:$true] %s45
      %51 = dma.hbm_to_vmem [thread:$0]  %s44, 2048, %s46, [#allocation6], 128, 128, 8
    $region17: #{tpu_custom_call.1} parent=1 // pred_fallthru
      _
    // Predicated region
    $region18: #{tpu_custom_call.1} parent=1 // pred_check
      _
    $region19: #{tpu_custom_call.1} parent=1 // pred_check_branch
      %53 = sbr.rel (0) target = $region21
    $region20: #{tpu_custom_call.1} parent=1 // pred_region
      _
    $region21: #{tpu_custom_call.1} parent=1 // pred_fallthru
      _
    // Predicated region
    $region22: #{tpu_custom_call.1} parent=1 // pred_check
      _
    $region23: #{tpu_custom_call.1} parent=1 // pred_check_branch
      %55 = sbr.rel (0) target = $region25
    $region24: #{tpu_custom_call.1} parent=1 // pred_region
      %57 = dma.done [#allocation3], 64
    $region25: #{tpu_custom_call.1} parent=1 // pred_fallthru
      _
    // Predicated region
    $region26: #{tpu_custom_call.1} parent=1 // pred_check
      _
    $region27: #{tpu_custom_call.1} parent=1 // pred_check_branch
      %59 = sbr.rel (0) target = $region29
    $region28: #{tpu_custom_call.1} parent=1 // pred_region
      %61 = dma.done [#allocation6], 2048
    $region29: #{tpu_custom_call.1} parent=1 // pred_fallthru
      _
    // Predicated region
    $region30: #{tpu_custom_call.1} parent=1 // pred_check
      _
    $region31: #{tpu_custom_call.1} parent=1 // pred_check_branch
      %63 = sbr.rel (0) target = $region33
    $region32: #{tpu_custom_call.1} parent=1 // pred_region
      %65 = dma.done [#allocation6], 2048
    $region33: #{tpu_custom_call.1} parent=1 // pred_fallthru
      _
    %v66 = vld [vmem:[#allocation2] sm:$0xf]
    %v67 = vmax.f32 %v66, 0.0
    %v68 = vld [vmem:[#allocation5] sm:$0xff]
    %v69 = vld [vmem:[#allocation5 + $0x8] sm:$0xff]
    %v70 = vld [vmem:[#allocation5 + $0x10] sm:$0xff]
    %v71 = vld [vmem:[#allocation5 + $0x18] sm:$0xff]
    %v72 = vld [vmem:[#allocation5 + $0x20] sm:$0xff]
    %v73 = vld [vmem:[#allocation5 + $0x28] sm:$0xff]
    %v74 = vld [vmem:[#allocation5 + $0x30] sm:$0xff]
    %v75 = vld [vmem:[#allocation5 + $0x38] sm:$0xff]
    %v76 = vld [vmem:[#allocation5 + $0x40] sm:$0xff]
    %v77 = vld [vmem:[#allocation5 + $0x48] sm:$0xff]
    %v78 = vld [vmem:[#allocation5 + $0x50] sm:$0xff]
    %v79 = vld [vmem:[#allocation5 + $0x58] sm:$0xff]
    %v80 = vld [vmem:[#allocation5 + $0x60] sm:$0xff]
    %v81 = vld [vmem:[#allocation5 + $0x68] sm:$0xff]
    %v82 = vld [vmem:[#allocation5 + $0x70] sm:$0xff]
    %v83 = vld [vmem:[#allocation5 + $0x78] sm:$0xff]
    %v84 = vld [vmem:[%s2] sm:$0x1]
    %v86 = vperm.slane %v84, 0
    %88 = vmatpush.msra.mxu0 %v83
    %89 = vmatpush.msra.mxu0 %v82
    %90 = vmatpush.msra.mxu0 %v81
    %91 = vmatpush.msra.mxu0 %v80
    %92 = vmatpush.msra.mxu0 %v79
    %93 = vmatpush.msra.mxu0 %v78
    %94 = vmatpush.msra.mxu0 %v77
    %95 = vmatpush.msra.mxu0 %v76
    %96 = vmatpush.msra.mxu0 %v75
    %97 = vmatpush.msra.mxu0 %v74
    %98 = vmatpush.msra.mxu0 %v73
    %99 = vmatpush.msra.mxu0 %v72
    %100 = vmatpush.msra.mxu0 %v71
    %101 = vmatpush.msra.mxu0 %v70
    %102 = vmatpush.msra.mxu0 %v69
    %103 = vmatpush.msra.mxu0 %v68
    %104 = vmatmul.f32.gmra.mxu0 %v67
    %v105 = vpop.f32.mrf.mxu0
    %v106 = vadd.f32 %v86, %v105
    %107 = vdwg.mxu0
    %v108 = vmax.f32 %v106, 0.0
    %v109 = vld [vmem:[#allocation7] sm:$0xff]
    %v110 = vld [vmem:[#allocation7 + $0x8] sm:$0xff]
    %v111 = vld [vmem:[#allocation7 + $0x10] sm:$0xff]
    %v112 = vld [vmem:[#allocation7 + $0x18] sm:$0xff]
    %v113 = vld [vmem:[#allocation7 + $0x20] sm:$0xff]
    %v114 = vld [vmem:[#allocation7 + $0x28] sm:$0xff]
    %v115 = vld [vmem:[#allocation7 + $0x30] sm:$0xff]
    %v116 = vld [vmem:[#allocation7 + $0x38] sm:$0xff]
    %v117 = vld [vmem:[#allocation7 + $0x40] sm:$0xff]
    %v118 = vld [vmem:[#allocation7 + $0x48] sm:$0xff]
    %v119 = vld [vmem:[#allocation7 + $0x50] sm:$0xff]
    %v120 = vld [vmem:[#allocation7 + $0x58] sm:$0xff]
    %v121 = vld [vmem:[#allocation7 + $0x60] sm:$0xff]
    %v122 = vld [vmem:[#allocation7 + $0x68] sm:$0xff]
    %v123 = vld [vmem:[#allocation7 + $0x70] sm:$0xff]
    %v124 = vld [vmem:[#allocation7 + $0x78] sm:$0xff]
    %v125 = vld [vmem:[%s4] sm:$0x1]
    %v127 = vperm.slane %v125, 0
    %129 = vmatpush.msra.mxu0 %v124
    %130 = vmatpush.msra.mxu0 %v123
    %131 = vmatpush.msra.mxu0 %v122
    %132 = vmatpush.msra.mxu0 %v121
    %133 = vmatpush.msra.mxu0 %v120
    %134 = vmatpush.msra.mxu0 %v119
    %135 = vmatpush.msra.mxu0 %v118
    %136 = vmatpush.msra.mxu0 %v117
    %137 = vmatpush.msra.mxu0 %v116
    %138 = vmatpush.msra.mxu0 %v115
    %139 = vmatpush.msra.mxu0 %v114
    %140 = vmatpush.msra.mxu0 %v113
    %141 = vmatpush.msra.mxu0 %v112
    %142 = vmatpush.msra.mxu0 %v111
    %143 = vmatpush.msra.mxu0 %v110
    %144 = vmatpush.msra.mxu0 %v109
    %145 = vmatmul.f32.gmra.mxu0 %v108
    %v146 = vpop.f32.mrf.mxu0
    %v147 = vadd.f32 %v127, %v146
    %148 = vdwg.mxu0
    %v149 = vadd.f32 %v66, %v147
    %150 = vst [vmem:[#allocation8] sm:$0xf] %v149
    // Predicated region
    $region34: #{tpu_custom_call.1} parent=1 // pred_check
      _
    $region35: #{tpu_custom_call.1} parent=1 // pred_check_branch
      %152 = sbr.rel (0) target = $region37
    $region36: #{tpu_custom_call.1} parent=1 // pred_region
      %154 = vsyncadd [#allocation4], 0
      %s156 = sshll.u32 [#allocation8], 4
      %s157 = int_to_ptr.vmem [resolvable:$true] %s156
      %s158 = sshll.u32 %s5, 4
      %s159 = int_to_ptr.hbm [resolvable:$true] %s158
      %161 = dma.vmem_to_hbm [thread:$0]  %s157, 64, %s159, [#allocation4]
    $region37: #{tpu_custom_call.1} parent=1 // pred_fallthru
      _
    // Predicated region
    $region38: #{tpu_custom_call.1} parent=1 // pred_check
      _
    $region39: #{tpu_custom_call.1} parent=1 // pred_check_branch
      %163 = sbr.rel (0) target = $region41
    $region40: #{tpu_custom_call.1} parent=1 // pred_region
      %165 = dma.done [#allocation4], 64
    $region41: #{tpu_custom_call.1} parent=1 // pred_fallthru
      _
    %166 = vsyncpa [#allocation3], 1
    %167 = vsyncpa [#allocation6], 1
    %168 = vsyncpa [#allocation4], 1

</llo_original>
